<compile_context>
chip_gen: v7x
topology: tpu7x:2x2x1
jax: 0.10.0
libtpu: 0.0.40
codegen_flags: <defaults>
</compile_context>

<pallas_src>
import math
from functools import partial

import jax
import jax.numpy as jnp
from jax.experimental import pallas as pl
from jax.experimental.pallas import tpu as pltpu

LANE = 128
SUBLANE = 8


def _round_up(x, m):
    return (x + m - 1) // m * m


# --------------------------------------------------------------------------
# Generation-aware VMEM configuration.
# --------------------------------------------------------------------------
def _vmem_config():
    """Returns (tile-choice budget, Mosaic vmem_limit_bytes, prefer>=2 steps)."""
    cap = None
    try:
        info = pltpu.get_tpu_info()
        cap = getattr(info, "vmem_capacity_bytes", None)
    except Exception:
        cap = None
    if not cap:
        cap = 64 * 1024 * 1024                       # conservative default
    if cap >= 100 * 1024 * 1024:                     # v5e / v6e: 128 MiB VMEM
        return 96 * 1024 * 1024, 110 * 1024 * 1024, False
    # v7x: 64 MiB per TensorCore, 2 TCs/chip -> modest limits, and prefer a
    # grid of >= 2 steps so megacore sharding has something to split.
    return 40 * 1024 * 1024, 48 * 1024 * 1024, True


# --------------------------------------------------------------------------
# One-time probe: is single-buffering (pl.Buffered(1)) of constant blocks
# supported by this Pallas version?
# --------------------------------------------------------------------------
_SINGLE_BUFFER_PARAMS_OK = None


def _single_buffer_params_ok():
    global _SINGLE_BUFFER_PARAMS_OK
    if _SINGLE_BUFFER_PARAMS_OK is None:
        try:
            def _k(a_ref, b_ref, o_ref):
                o_ref[...] = a_ref[...] + b_ref[...]

            out = pl.pallas_call(
                _k,
                out_shape=jax.ShapeDtypeStruct((SUBLANE, LANE), jnp.float32),
                grid_spec=pltpu.PrefetchScalarGridSpec(
                    num_scalar_prefetch=0,
                    grid=(1,),
                    in_specs=[
                        pl.BlockSpec((SUBLANE, LANE), lambda i: (0, 0)),
                        pl.BlockSpec((SUBLANE, LANE), lambda i: (0, 0),
                                     pipeline_mode=pl.Buffered(1)),
                    ],
                    out_specs=pl.BlockSpec((SUBLANE, LANE), lambda i: (0, 0))),
            )(jnp.zeros((SUBLANE, LANE), jnp.float32),
              jnp.ones((SUBLANE, LANE), jnp.float32))
            jax.block_until_ready(out)
            _SINGLE_BUFFER_PARAMS_OK = True
        except Exception:
            _SINGLE_BUFFER_PARAMS_OK = False
    return _SINGLE_BUFFER_PARAMS_OK


# --------------------------------------------------------------------------
# Kernel: full layer stack, activation resident in VMEM between layers.
# --------------------------------------------------------------------------
def _fused_mlp_kernel(*refs, dims, eps, dot_dtype, emit_trace):
    """refs = (x, packed_vectors, W_0..W_{L-1}, out_0..).

    dims[i] = (h1, h2, h1p, h2p) true / lane-padded feature counts of layer i.
    packed_vectors rows: [gamma_i, beta_i, bias_i] at rows 3i..3i+2 (f32,
    zero on padded lanes).
    """
    n_layers = len(dims)
    x_ref = refs[0]
    vec_ref = refs[1]
    w_refs = refs[2:2 + n_layers]
    out_refs = refs[2 + n_layers:]

    h = x_ref[...].astype(jnp.float32)           # [TILE_B, H0p], f32 internally
    oi = 0
    for i, (h1, h2, h1p, h2p) in enumerate(dims):
        gamma = vec_ref[3 * i:3 * i + 1, :h1p]       # (1, h1p) f32
        beta = vec_ref[3 * i + 1:3 * i + 2, :h1p]
        bias = vec_ref[3 * i + 2:3 * i + 3, :h2p]

        # --- LayerNorm over the TRUE feature count, two-pass variance.
        # Padded lanes of h are exactly zero, so the mean sum is exact; the
        # centered values are masked on padded lanes so the variance is too.
        inv_n = 1.0 / float(h1)
        mean = jnp.sum(h, axis=-1, keepdims=True) * inv_n
        centered = h - mean
        if h1p != h1:
            lane = jax.lax.broadcasted_iota(jnp.int32, (1, h1p), 1)
            centered = jnp.where(lane < h1, centered, 0.0)
        var = jnp.sum(centered * centered, axis=-1, keepdims=True) * inv_n
        inv_std = jax.lax.rsqrt(var + eps)
        normed = centered * inv_std * gamma + beta   # padded lanes stay zero
        if emit_trace:
            out_refs[oi][...] = normed.astype(out_refs[oi].dtype)
            oi += 1

        # --- Linear on the MXU (bf16 operands in the fast path, f32 accum).
        fc = jnp.dot(normed.astype(dot_dtype),
                     w_refs[i][...].astype(dot_dtype),
                     preferred_element_type=jnp.float32) + bias
        if emit_trace:
            out_refs[oi][...] = fc.astype(out_refs[oi].dtype)
            oi += 1

        # --- ReLU.
        h = jnp.maximum(fc, 0.0)
        if emit_trace:
            out_refs[oi][...] = h.astype(out_refs[oi].dtype)
            oi += 1
        elif i == n_layers - 1:
            out_refs[oi][...] = h.astype(out_refs[oi].dtype)
            oi += 1


# --------------------------------------------------------------------------
# Host-side helpers: parameter packing, tiling, pallas_call construction.
# --------------------------------------------------------------------------
def _pack_params(params, weight_dtype):
    """Zero-pad feature dims to the 128-lane width.  Weights stay one array
    per layer; the 1-row vectors (gamma, beta, bias) are packed into a single
    stacked [rows, Hmax] f32 array (3 rows per layer)."""
    dims, weights = [], []
    for p in params:
        h1, h2 = p["w"].shape
        h1p, h2p = _round_up(h1, LANE), _round_up(h2, LANE)
        dims.append((h1, h2, h1p, h2p))
        w = jnp.zeros((h1p, h2p), weight_dtype).at[:h1, :h2].set(
            p["w"].astype(weight_dtype))
        weights.append(w)
    hmax = max(max(h1p, h2p) for (_, _, h1p, h2p) in dims)
    rows = _round_up(3 * len(params), SUBLANE)
    vec = jnp.zeros((rows, hmax), jnp.float32)
    for i, p in enumerate(params):
        h1, h2, _, _ = dims[i]
        vec = vec.at[3 * i, :h1].set(p["gamma"].astype(jnp.float32))
        vec = vec.at[3 * i + 1, :h1].set(p["beta"].astype(jnp.float32))
        vec = vec.at[3 * i + 2, :h2].set(p["b"].astype(jnp.float32))
    return weights, vec, dims


def _tile_vmem_bytes(tile_b, h0p, dims, emit_trace, x_isz, out_isz, w_isz,
                     vec_shape, param_bufs):
    in_t = tile_b * h0p * x_isz
    if emit_trace:
        out_t = sum(tile_b * (h1p + 2 * h2p) * out_isz
                    for (_, _, h1p, h2p) in dims)
    else:
        out_t = tile_b * dims[-1][3] * out_isz
    param_b = (vec_shape[0] * vec_shape[1] * 4 +
               sum(h1p * h2p * w_isz for (_, _, h1p, h2p) in dims))
    widest = max(h0p, max(max(h1p, h2p) for (_, _, h1p, h2p) in dims))
    work = 6 * tile_b * widest * 4                 # live f32 temporaries
    return 2 * (in_t + out_t) + param_bufs * param_b + work


def _choose_tile_b(B, h0p, dims, emit_trace, budget, x_isz, out_isz, w_isz,
                   vec_shape, param_bufs, prefer_two_steps):
    # Start from the largest bandwidth/MXU-friendly tile the budget allows.
    tile_b = min(_round_up(max(B, 1), SUBLANE), 1024)
    if tile_b >= 256:
        tile_b = _round_up(tile_b, 256)    # amortize RHS pushes into the MXU
    elif tile_b >= 128:
        tile_b = _round_up(tile_b, 128)
    while (tile_b > SUBLANE and
           _tile_vmem_bytes(tile_b, h0p, dims, emit_trace, x_isz, out_isz,
                            w_isz, vec_shape, param_bufs) > budget):
        tile_b = max(SUBLANE, _round_up(tile_b // 2, SUBLANE))
    if prefer_two_steps and B > SUBLANE and tile_b >= _round_up(B, SUBLANE):
        # v7x: at least 2 grid steps so the second TensorCore isn't idle.
        tile_b = max(SUBLANE, min(tile_b, _round_up(pl.cdiv(B, 2), SUBLANE)))
    return tile_b


def _prepare_input(x2d, Bp, h0, h0p, dtype):
    """Avoid the full materialized padding copy whenever possible."""
    B = x2d.shape[0]
    xc = x2d if x2d.dtype == dtype else x2d.astype(dtype)
    if B == Bp and h0 == h0p:
        return xc                                   # pass-through
    if h0 == h0p:
        return jnp.pad(xc, ((0, Bp - B), (0, 0)))   # batch-axis pad only
    out = jnp.zeros((Bp, h0p), dtype)
    return out.at[:B, :h0].set(xc)


def _fused_call(xp, weights, vec, dims, *, tile_b, emit_trace, dot_dtype, eps,
                out_dtype, vmem_limit, single_buffer_params):
    n_layers = len(dims)
    Bp, h0p = xp.shape
    grid = (Bp // tile_b,)

    def const_spec(shape):
        if single_buffer_params:
            return pl.BlockSpec(shape, lambda i: (0, 0),
                                pipeline_mode=pl.Buffered(1))
        return pl.BlockSpec(shape, lambda i: (0, 0))

    in_specs = ([pl.BlockSpec((tile_b, h0p), lambda i: (i, 0)),
                 const_spec(vec.shape)] +
                [const_spec(w.shape) for w in weights])

    out_shapes, out_specs = [], []
    if emit_trace:
        for (_, _, h1p, h2p) in dims:
            for hp in (h1p, h2p, h2p):              # normed, fc, act
                out_shapes.append(jax.ShapeDtypeStruct((Bp, hp), out_dtype))
                out_specs.append(pl.BlockSpec((tile_b, hp), lambda i: (i, 0)))
    else:
        hlp = dims[-1][3]
        out_shapes.append(jax.ShapeDtypeStruct((Bp, hlp), out_dtype))
        out_specs.append(pl.BlockSpec((tile_b, hlp), lambda i: (i, 0)))

    # Advisory cost estimate for XLA scheduling around the custom call.
    flops = 2 * Bp * sum(h1p * h2p for (_, _, h1p, h2p) in dims)
    bytes_in = (xp.size * jnp.dtype(xp.dtype).itemsize +
                vec.size * 4 +
                sum(w.size * jnp.dtype(w.dtype).itemsize for w in weights))
    bytes_out = sum(math.prod(s.shape) * jnp.dtype(s.dtype).itemsize
                    for s in out_shapes)
    cost = pl.CostEstimate(flops=int(flops), transcendentals=int(Bp * n_layers),
                           bytes_accessed=int(bytes_in + bytes_out))

    kernel = partial(_fused_mlp_kernel, dims=tuple(dims), eps=eps,
                     dot_dtype=dot_dtype, emit_trace=emit_trace)

    fn = pl.pallas_call(
        kernel,
        out_shape=tuple(out_shapes),
        grid_spec=pltpu.PrefetchScalarGridSpec(
            num_scalar_prefetch=0,
            grid=grid,
            in_specs=in_specs,
            out_specs=tuple(out_specs)),
        compiler_params=pltpu.CompilerParams(
            dimension_semantics=("parallel",),
            vmem_limit_bytes=vmem_limit),
        cost_estimate=cost,
    )
    outs = fn(xp, vec, *weights)
    if not isinstance(outs, (tuple, list)):
        outs = (outs,)
    return outs


# --------------------------------------------------------------------------
# Public forward passes.
# --------------------------------------------------------------------------
def mlp_forward_fast(x, params, *, eps=1e-5):
    """Fast path: one fused kernel; bf16 activation DMA + bf16 MXU, f32 LN
    stats & accumulation; only the final activation is stored (bf16)."""
    B = x.shape[0]
    x2d = x.reshape(B, -1)
    weights, vec, dims = _pack_params(params, jnp.bfloat16)
    h0, h0p = dims[0][0], dims[0][2]
    budget, limit, prefer_two = _vmem_config()
    single_buf = _single_buffer_params_ok()
    param_bufs = 1 if single_buf else 2
    tile_b = _choose_tile_b(B, h0p, dims, False, budget, 2, 2, 2,
                            vec.shape, param_bufs, prefer_two)
    Bp = _round_up(B, tile_b)
    # If the caller already supplies bf16, this is a pass-through (no copy).
    xp = _prepare_input(x2d, Bp, h0, h0p, jnp.bfloat16)
    outs = _fused_call(xp, weights, vec, dims, tile_b=tile_b, emit_trace=False,
                       dot_dtype=jnp.bfloat16, eps=eps, out_dtype=jnp.bfloat16,
                       vmem_limit=limit, single_buffer_params=single_buf)
    return outs[0][:B, :dims[-1][1]].astype(jnp.float32)


def mlp_forward(x, params, *, eps=1e-5):
    """Debug/trace path (f32): reproduces MLP.forward -> (output, hidden_layers)."""
    B = x.shape[0]
    x2d = x.reshape(B, -1).astype(jnp.float32)
    weights, vec, dims = _pack_params(params, jnp.float32)
    h0, h0p = dims[0][0], dims[0][2]
    budget, limit, prefer_two = _vmem_config()
    single_buf = _single_buffer_params_ok()
    param_bufs = 1 if single_buf else 2
    tile_b = _choose_tile_b(B, h0p, dims, True, budget, 4, 4, 4,
                            vec.shape, param_bufs, prefer_two)
    Bp = _round_up(B, tile_b)
    xp = _prepare_input(x2d, Bp, h0, h0p, jnp.float32)
    outs = _fused_call(xp, weights, vec, dims, tile_b=tile_b, emit_trace=True,
                       dot_dtype=jnp.float32, eps=eps, out_dtype=jnp.float32,
                       vmem_limit=limit, single_buffer_params=single_buf)

    hidden_layers = []
    h_in = x2d
    oi = 0
    for i, (h1, h2, _, _) in enumerate(dims):
        normed = outs[oi][:B, :h1]; oi += 1
        fc = outs[oi][:B, :h2]; oi += 1
        act = outs[oi][:B, :h2]; oi += 1
        hidden_layers.append((f"norm-{i}", h_in, normed))
        hidden_layers.append((f"fc-{i}", normed, fc))
        hidden_layers.append((f"act-{i}", fc, act))
        h_in = act
    return h_in, hidden_layers


# --------------------------------------------------------------------------
# Parameter init mirroring MLP.__init__ / init_weights.
# --------------------------------------------------------------------------
def init_mlp_params(key, input_size, hidden_sizes, num_classes):
    """Linear W ~ N(0, 1/sqrt(fan_in)) (init_weights); bias uniform (PyTorch
    default); LayerNorm gamma=1, beta=0 (PyTorch default)."""
    sizes = [input_size] + list(hidden_sizes) + [num_classes]
    params = []
    for h1, h2 in zip(sizes[:-1], sizes[1:]):
        key, kw, kb = jax.random.split(key, 3)
        std = 1.0 / math.sqrt(h1)
        w = (jax.random.normal(kw, (h2, h1), dtype=jnp.float32) * std).T  # [in,out]
        b = jax.random.uniform(kb, (h2,), dtype=jnp.float32, minval=-std, maxval=std)
        params.append(dict(gamma=jnp.ones((h1,), jnp.float32),
                           beta=jnp.zeros((h1,), jnp.float32), w=w, b=b))
    return params


# --------------------------------------------------------------------------
# Demo + correctness checks.
# --------------------------------------------------------------------------
if __name__ == "__main__":
    key = jax.random.PRNGKey(0)
    key, kx = jax.random.split(key)

    B, C, H, W = 2, 4, 16, 16
    input_size = C * H * W       # 1024 (already a multiple of 128 -> no feature pad)
    hidden_sizes = [128]
    num_classes = 32

    x = jax.random.normal(kx, (B, C, H, W), dtype=jnp.float32)
    params = init_mlp_params(key, input_size, hidden_sizes, num_classes)

    # Fast path (jitted): fused kernel, bf16 activations/MXU, bf16 output store.
    fast_fn = jax.jit(lambda xx: mlp_forward_fast(xx, params))
    out_fast = jax.block_until_ready(fast_fn(x))

    # Trace path (eager, f32): reproduces (output, hidden_layers).
    out_trace, hidden_layers = mlp_forward(x, params)
    out_trace = jax.block_until_ready(out_trace)
    for _, _, o in hidden_layers:
        jax.block_until_ready(o)

    # Pure-JAX references (PyTorch LayerNorm formula: biased two-pass variance).
    def ref_forward(x, params, dot_dtype=jnp.float32, eps=1e-5,
                    cast_input=False, cast_output=False):
        h = x.reshape(x.shape[0], -1).astype(jnp.float32)
        if cast_input:
            h = h.astype(jnp.bfloat16).astype(jnp.float32)
        trace = []
        for p in params:
            mu = h.mean(-1, keepdims=True)
            var = ((h - mu) ** 2).mean(-1, keepdims=True)
            n = (h - mu) / jnp.sqrt(var + eps) * p["gamma"] + p["beta"]
            fc = jnp.dot(n.astype(dot_dtype), p["w"].astype(dot_dtype),
                         preferred_element_type=jnp.float32) + p["b"]
            a = jnp.maximum(fc, 0.0)
            trace.append((n, fc, a))
            h = a
        if cast_output:
            h = h.astype(jnp.bfloat16).astype(jnp.float32)
        return h, trace

    ref_out, ref_trace = ref_forward(x, params)
    ref_out_bf16, _ = ref_forward(x, params, dot_dtype=jnp.bfloat16,
                                  cast_input=True, cast_output=True)

    assert out_fast.shape == (B, num_classes)
    assert out_trace.shape == (B, num_classes)
    assert len(hidden_layers) == 3 * (len(hidden_sizes) + 1)

    # Trace path matches the f32 reference tightly (output + all intermediates).
    assert jnp.allclose(out_trace, ref_out, atol=1e-3, rtol=1e-3)
    for i, (rn, rfc, ra) in enumerate(ref_trace):
        assert hidden_layers[3 * i][0] == f"norm-{i}"
        assert jnp.allclose(hidden_layers[3 * i][2], rn, atol=1e-3, rtol=1e-3)
        assert jnp.allclose(hidden_layers[3 * i + 1][2], rfc, atol=1e-3, rtol=1e-3)
        assert jnp.allclose(hidden_layers[3 * i + 2][2], ra, atol=1e-3, rtol=1e-3)

    # Fast path matches the bf16-emulated reference, and the f32 one loosely.
    assert jnp.allclose(out_fast, ref_out_bf16, atol=2e-2, rtol=2e-2)
    assert jnp.allclose(out_fast, ref_out, atol=5e-2, rtol=5e-2)

    print("KERNEL_OK")
</pallas_src>

<mosaic_0001>
module attributes {stable_mosaic.version = 11 : i64} {
  func.func @_fused_mlp_kernel(%arg0: i32, %arg1: memref<8x1024xbf16, #tpu.memory_space<vmem>>, %arg2: memref<8x1024xf32, #tpu.memory_space<vmem>>, %arg3: memref<1024x128xbf16, #tpu.memory_space<vmem>>, %arg4: memref<128x128xbf16, #tpu.memory_space<vmem>>, %arg5: memref<8x128xbf16, #tpu.memory_space<vmem>>) attributes {dimension_semantics = [#tpu.dimension_semantics<parallel>], iteration_bounds = array<i64: 1>, scalar_prefetch = 0 : i64, scratch_operands = 0 : i64, tpu.core_type = #tpu.core_type<tc>, window_params = [{transform_indices = @transform_0, window_bounds = array<i64: 8, 1024>}, {pipeline_mode = #tpu.pipeline_mode<synchronous>, transform_indices = @transform_1, window_bounds = array<i64: 8, 1024>}, {pipeline_mode = #tpu.pipeline_mode<synchronous>, transform_indices = @transform_2, window_bounds = array<i64: 1024, 128>}, {pipeline_mode = #tpu.pipeline_mode<synchronous>, transform_indices = @transform_3, window_bounds = array<i64: 128, 128>}, {transform_indices = @transform_4, window_bounds = array<i64: 8, 128>}]} {
    %c0 = arith.constant 0 : index
    %c0_0 = arith.constant 0 : index
    %0 = vector.load %arg1[%c0, %c0_0] : memref<8x1024xbf16, #tpu.memory_space<vmem>>, vector<8x1024xbf16>
    %1 = arith.extf %0 : vector<8x1024xbf16> to vector<8x1024xf32>
    %c0_1 = arith.constant 0 : index
    %c0_2 = arith.constant 0 : index
    %2 = vector.load %arg2[%c0_1, %c0_2] : memref<8x1024xf32, #tpu.memory_space<vmem>>, vector<1x1024xf32>
    %c1 = arith.constant 1 : index
    %c0_3 = arith.constant 0 : index
    %3 = vector.load %arg2[%c1, %c0_3] : memref<8x1024xf32, #tpu.memory_space<vmem>>, vector<1x1024xf32>
    %c2 = arith.constant 2 : index
    %c0_4 = arith.constant 0 : index
    %4 = vector.load %arg2[%c2, %c0_4] : memref<8x1024xf32, #tpu.memory_space<vmem>>, vector<1x128xf32>
    %cst = arith.constant dense<0.000000e+00> : vector<8xf32>
    %5 = vector.multi_reduction <add>, %1, %cst [1] : vector<8x1024xf32> to vector<8xf32>
    %6 = vector.shape_cast %5 : vector<8xf32> to vector<8x1xf32>
    %cst_5 = arith.constant 9.765625E-4 : f32
    %7 = vector.broadcast %cst_5 : f32 to vector<8x1xf32>
    %8 = arith.mulf %6, %7 : vector<8x1xf32>
    %9 = vector.broadcast %8 : vector<8x1xf32> to vector<8x1024xf32>
    %10 = arith.subf %1, %9 : vector<8x1024xf32>
    %11 = arith.mulf %10, %10 : vector<8x1024xf32>
    %cst_6 = arith.constant dense<0.000000e+00> : vector<8xf32>
    %12 = vector.multi_reduction <add>, %11, %cst_6 [1] : vector<8x1024xf32> to vector<8xf32>
    %13 = vector.shape_cast %12 : vector<8xf32> to vector<8x1xf32>
    %cst_7 = arith.constant 9.765625E-4 : f32
    %14 = vector.broadcast %cst_7 : f32 to vector<8x1xf32>
    %15 = arith.mulf %13, %14 : vector<8x1xf32>
    %cst_8 = arith.constant 9.99999974E-6 : f32
    %16 = vector.broadcast %cst_8 : f32 to vector<8x1xf32>
    %17 = arith.addf %15, %16 : vector<8x1xf32>
    %18 = math.rsqrt %17 : vector<8x1xf32>
    %19 = vector.broadcast %18 : vector<8x1xf32> to vector<8x1024xf32>
    %20 = arith.mulf %10, %19 : vector<8x1024xf32>
    %21 = vector.broadcast %2 : vector<1x1024xf32> to vector<8x1024xf32>
    %22 = arith.mulf %20, %21 : vector<8x1024xf32>
    %23 = vector.broadcast %3 : vector<1x1024xf32> to vector<8x1024xf32>
    %24 = arith.addf %22, %23 : vector<8x1024xf32>
    %25 = arith.truncf %24 : vector<8x1024xf32> to vector<8x1024xbf16>
    %c0_9 = arith.constant 0 : index
    %c0_10 = arith.constant 0 : index
    %26 = vector.load %arg3[%c0_9, %c0_10] : memref<1024x128xbf16, #tpu.memory_space<vmem>>, vector<1024x128xbf16>
    %cst_11 = arith.constant dense<0.000000e+00> : vector<8x128xf32>
    %27 = tpu.matmul %25, %26, %cst_11 {dimension_numbers = #tpu.dot_dimension_numbers<[1], [0], [0], [1], [0, 0, 1, 1], [], []>} : vector<8x1024xbf16>, vector<1024x128xbf16>, vector<8x128xf32> -> vector<8x128xf32>
    %28 = vector.broadcast %4 : vector<1x128xf32> to vector<8x128xf32>
    %29 = arith.addf %27, %28 : vector<8x128xf32>
    %cst_12 = arith.constant 0.000000e+00 : f32
    %30 = vector.broadcast %cst_12 : f32 to vector<8x128xf32>
    %31 = arith.maximumf %29, %30 : vector<8x128xf32>
    %c3 = arith.constant 3 : index
    %c0_13 = arith.constant 0 : index
    %32 = vector.load %arg2[%c3, %c0_13] : memref<8x1024xf32, #tpu.memory_space<vmem>>, vector<1x128xf32>
    %c4 = arith.constant 4 : index
    %c0_14 = arith.constant 0 : index
    %33 = vector.load %arg2[%c4, %c0_14] : memref<8x1024xf32, #tpu.memory_space<vmem>>, vector<1x128xf32>
    %c5 = arith.constant 5 : index
    %c0_15 = arith.constant 0 : index
    %34 = vector.load %arg2[%c5, %c0_15] : memref<8x1024xf32, #tpu.memory_space<vmem>>, vector<1x128xf32>
    %cst_16 = arith.constant dense<0.000000e+00> : vector<8xf32>
    %35 = vector.multi_reduction <add>, %31, %cst_16 [1] : vector<8x128xf32> to vector<8xf32>
    %36 = vector.shape_cast %35 : vector<8xf32> to vector<8x1xf32>
    %cst_17 = arith.constant 7.812500e-03 : f32
    %37 = vector.broadcast %cst_17 : f32 to vector<8x1xf32>
    %38 = arith.mulf %36, %37 : vector<8x1xf32>
    %39 = vector.broadcast %38 : vector<8x1xf32> to vector<8x128xf32>
    %40 = arith.subf %31, %39 : vector<8x128xf32>
    %41 = arith.mulf %40, %40 : vector<8x128xf32>
    %cst_18 = arith.constant dense<0.000000e+00> : vector<8xf32>
    %42 = vector.multi_reduction <add>, %41, %cst_18 [1] : vector<8x128xf32> to vector<8xf32>
    %43 = vector.shape_cast %42 : vector<8xf32> to vector<8x1xf32>
    %cst_19 = arith.constant 7.812500e-03 : f32
    %44 = vector.broadcast %cst_19 : f32 to vector<8x1xf32>
    %45 = arith.mulf %43, %44 : vector<8x1xf32>
    %cst_20 = arith.constant 9.99999974E-6 : f32
    %46 = vector.broadcast %cst_20 : f32 to vector<8x1xf32>
    %47 = arith.addf %45, %46 : vector<8x1xf32>
    %48 = math.rsqrt %47 : vector<8x1xf32>
    %49 = vector.broadcast %48 : vector<8x1xf32> to vector<8x128xf32>
    %50 = arith.mulf %40, %49 : vector<8x128xf32>
    %51 = vector.broadcast %32 : vector<1x128xf32> to vector<8x128xf32>
    %52 = arith.mulf %50, %51 : vector<8x128xf32>
    %53 = vector.broadcast %33 : vector<1x128xf32> to vector<8x128xf32>
    %54 = arith.addf %52, %53 : vector<8x128xf32>
    %55 = arith.truncf %54 : vector<8x128xf32> to vector<8x128xbf16>
    %c0_21 = arith.constant 0 : index
    %c0_22 = arith.constant 0 : index
    %56 = vector.load %arg4[%c0_21, %c0_22] : memref<128x128xbf16, #tpu.memory_space<vmem>>, vector<128x128xbf16>
    %cst_23 = arith.constant dense<0.000000e+00> : vector<8x128xf32>
    %57 = tpu.matmul %55, %56, %cst_23 {dimension_numbers = #tpu.dot_dimension_numbers<[1], [0], [0], [1], [0, 0, 1, 1], [], []>} : vector<8x128xbf16>, vector<128x128xbf16>, vector<8x128xf32> -> vector<8x128xf32>
    %58 = vector.broadcast %34 : vector<1x128xf32> to vector<8x128xf32>
    %59 = arith.addf %57, %58 : vector<8x128xf32>
    %cst_24 = arith.constant 0.000000e+00 : f32
    %60 = vector.broadcast %cst_24 : f32 to vector<8x128xf32>
    %61 = arith.maximumf %59, %60 : vector<8x128xf32>
    %62 = arith.truncf %61 : vector<8x128xf32> to vector<8x128xbf16>
    %c0_25 = arith.constant 0 : index
    %c0_26 = arith.constant 0 : index
    %63 = vector.load %arg5[%c0_25, %c0_26] : memref<8x128xbf16, #tpu.memory_space<vmem>>, vector<8x128xbf16>
    tpu.vector_store %arg5[%c0_25, %c0_26], %62 {strides = array<i32>} : memref<8x128xbf16, #tpu.memory_space<vmem>>, vector<8x128xbf16>,
    return
  }
  func.func @transform_0(%arg0: i32) -> (i32, i32) {
    %c0_i32 = arith.constant 0 : i32
    %c0_i32_0 = arith.constant 0 : i32
    return %arg0, %c0_i32 : i32, i32
  }
  func.func @transform_1(%arg0: i32) -> (i32, i32) {
    %c0_i32 = arith.constant 0 : i32
    %c0_i32_0 = arith.constant 0 : i32
    %c0_i32_1 = arith.constant 0 : i32
    return %c0_i32, %c0_i32_0 : i32, i32
  }
  func.func @transform_2(%arg0: i32) -> (i32, i32) {
    %c0_i32 = arith.constant 0 : i32
    %c0_i32_0 = arith.constant 0 : i32
    %c0_i32_1 = arith.constant 0 : i32
    return %c0_i32, %c0_i32_0 : i32, i32
  }
  func.func @transform_3(%arg0: i32) -> (i32, i32) {
    %c0_i32 = arith.constant 0 : i32
    %c0_i32_0 = arith.constant 0 : i32
    %c0_i32_1 = arith.constant 0 : i32
    return %c0_i32, %c0_i32_0 : i32, i32
  }
  func.func @transform_4(%arg0: i32) -> (i32, i32) {
    %c0_i32 = arith.constant 0 : i32
    %c0_i32_0 = arith.constant 0 : i32
    return %arg0, %c0_i32 : i32, i32
  }
}

</mosaic_0001>

<llo_original>
// kernel: _lambda_.1
$region0: #{_lambda_.1}
  #allocation0 [shape = 'u32[]', space=smem, size = 0x4, offset = 0x4, fixed_abs, tag = 'smem constant byte address 0x4 - core index']
  #allocation1 [shape = 'u32[144,128]{1,0:T(1,128)}', space=vmem, size = 0x12000, scoped, tag = 'internal scratch']
  %s0 = inlined_call_operand.vmem [shape: bf16[8,1024], index: 0, kind: input, shape index: {}]
  %s1 = inlined_call_operand.vmem [shape: f32[8,1024], index: 1, kind: input, shape index: {}]
  %s2 = inlined_call_operand.vmem [shape: bf16[1024,128], index: 2, kind: input, shape index: {}]
  %s3 = inlined_call_operand.vmem [shape: bf16[128,128], index: 3, kind: input, shape index: {}]
  %s4 = inlined_call_operand.vmem [shape: bf16[8,128], index: 4, kind: output, shape index: {}]
  %s5 = sld [smem:[#allocation0]]
  $region26: #{_lambda_.1} parent=0
    _
  %s7 = ssub.s32 1, %s5
  %s8 = scalar_select 0, %s7, %s5
  // Predicated region
  $region2: #{_lambda_.1} parent=0 // pred_check
    _
  $region3: #{_lambda_.1} parent=0 // pred_check_branch
    %10 = sbr.rel (0) target = $region5
  $region4: #{_lambda_.1} parent=0 // pred_region
    _
  $region5: #{_lambda_.1} parent=0 // pred_fallthru
    _
  // Predicated region
  $region6: #{_lambda_.1} parent=0 // pred_check
    _
  $region7: #{_lambda_.1} parent=0 // pred_check_branch
    %12 = sbr.rel (0) target = $region9
  $region8: #{_lambda_.1} parent=0 // pred_region
    _
  $region9: #{_lambda_.1} parent=0 // pred_fallthru
    _
  // Predicated region
  $region10: #{_lambda_.1} parent=0 // pred_check
    _
  $region11: #{_lambda_.1} parent=0 // pred_check_branch
    %14 = sbr.rel (0) target = $region13
  $region12: #{_lambda_.1} parent=0 // pred_region
    _
  $region13: #{_lambda_.1} parent=0 // pred_fallthru
    _
  // Predicated region
  $region14: #{_lambda_.1} parent=0 // pred_check
    _
  $region15: #{_lambda_.1} parent=0 // pred_check_branch
    %16 = sbr.rel (0) target = $region17
  $region16: #{_lambda_.1} parent=0 // pred_region
    _
  $region17: #{_lambda_.1} parent=0 // pred_fallthru
    _
  %v18 = vld [vmem:[%s0] sm:$0xff]
  %v19 = vld [vmem:[%s0 + $0x8] sm:$0xff]
  %v20 = vld [vmem:[%s0 + $0x10] sm:$0xff]
  %v21 = vld [vmem:[%s0 + $0x18] sm:$0xff]
  %v22 = vunpack.c.l.bf16 %v18
  %v23 = vunpack.c.h.bf16 %v18
  %v24 = vunpack.c.l.bf16 %v19
  %v25 = vunpack.c.h.bf16 %v19
  %v26 = vunpack.c.l.bf16 %v20
  %v27 = vunpack.c.h.bf16 %v20
  %v28 = vunpack.c.l.bf16 %v21
  %v29 = vunpack.c.h.bf16 %v21
  %v30 = vld [vmem:[%s1] ss:$8 sm:$0xf]
  %v31 = vld [vmem:[%s1] ss:$8 sm:$0xf0]
  %v32 = vor.u32 %v30, %v31
  %s33 = scalar_lea.vmem %s1, 1
  %v34 = vld [vmem:[%s33] ss:$8 sm:$0xf]
  %v35 = vld [vmem:[%s33] ss:$8 sm:$0xf0]
  %v36 = vor.u32 %v34, %v35
  %v37 = vld [vmem:[%s1 + $0x2] ss:$0 sm:$0xff]
  %v38 = vadd.f32 %v22, %v23
  %v39 = vadd.f32 %v38, %v24
  %v40 = vadd.f32 %v39, %v25
  %v41 = vadd.f32 %v40, %v26
  %v42 = vadd.f32 %v41, %v27
  %v43 = vadd.f32 %v42, %v28
  %v44 = vadd.f32 %v43, %v29
  %45 = vadd.xlane.f32.xlu0 %v44
  %v46 = vpop.xlane.xlu0 %45
  %v47 = vmul.f32 %v46, 0.0009765625
  %v48 = vsub.f32 %v22, %v47
  %v49 = vsub.f32 %v23, %v47
  %v50 = vsub.f32 %v24, %v47
  %v51 = vsub.f32 %v25, %v47
  %v52 = vsub.f32 %v26, %v47
  %v53 = vsub.f32 %v27, %v47
  %v54 = vsub.f32 %v28, %v47
  %v55 = vsub.f32 %v29, %v47
  %v56 = vmul.f32 %v48, %v48
  %v57 = vmul.f32 %v49, %v49
  %v58 = vmul.f32 %v50, %v50
  %v59 = vmul.f32 %v51, %v51
  %v60 = vmul.f32 %v52, %v52
  %v61 = vmul.f32 %v53, %v53
  %v62 = vmul.f32 %v54, %v54
  %v63 = vmul.f32 %v55, %v55
  %v64 = vadd.f32 %v56, %v57
  %v65 = vadd.f32 %v64, %v58
  %v66 = vadd.f32 %v65, %v59
  %v67 = vadd.f32 %v66, %v60
  %v68 = vadd.f32 %v67, %v61
  %v69 = vadd.f32 %v68, %v62
  %v70 = vadd.f32 %v69, %v63
  %71 = vadd.xlane.f32.xlu0 %v70
  %v72 = vpop.xlane.xlu0 %71
  %v73 = vmul.f32 %v72, 0.0009765625
  %v74 = vadd.f32 %v73, 1e-05
  %v75 = vrsqrt.pop %v74
  %v76 = vmul.f32 %v48, %v75
  %v77 = vmul.f32 %v49, %v75
  %v78 = vmul.f32 %v50, %v75
  %v79 = vmul.f32 %v51, %v75
  %v80 = vmul.f32 %v52, %v75
  %v81 = vmul.f32 %v53, %v75
  %v82 = vmul.f32 %v54, %v75
  %v83 = vmul.f32 %v55, %v75
  %v85 = vlaneseq
  %v86 = vshrl.u32 %v85, 7
  %v87 = vsub.s32 0, %v86
  %v88 = vrot.slane %v32, %v87
  %v89 = vlaneseq
  %v90 = vshrl.u32 %v89, 7
  %v91 = vsub.s32 1, %v90
  %v92 = vrot.slane %v32, %v91
  %v93 = vlaneseq
  %v94 = vshrl.u32 %v93, 7
  %v95 = vsub.s32 2, %v94
  %v96 = vrot.slane %v32, %v95
  %v97 = vlaneseq
  %v98 = vshrl.u32 %v97, 7
  %v99 = vsub.s32 3, %v98
  %v100 = vrot.slane %v32, %v99
  %v101 = vlaneseq
  %v102 = vshrl.u32 %v101, 7
  %v103 = vsub.s32 4, %v102
  %v104 = vrot.slane %v32, %v103
  %v105 = vlaneseq
  %v106 = vshrl.u32 %v105, 7
  %v107 = vsub.s32 5, %v106
  %v108 = vrot.slane %v32, %v107
  %v109 = vlaneseq
  %v110 = vshrl.u32 %v109, 7
  %v111 = vsub.s32 6, %v110
  %v112 = vrot.slane %v32, %v111
  %v113 = vlaneseq
  %v114 = vshrl.u32 %v113, 7
  %v115 = vsub.s32 7, %v114
  %v116 = vrot.slane %v32, %v115
  %v125 = vmul.f32 %v76, %v88
  %v126 = vmul.f32 %v77, %v92
  %v127 = vmul.f32 %v78, %v96
  %v128 = vmul.f32 %v79, %v100
  %v129 = vmul.f32 %v80, %v104
  %v130 = vmul.f32 %v81, %v108
  %v131 = vmul.f32 %v82, %v112
  %v132 = vmul.f32 %v83, %v116
  %v134 = vlaneseq
  %v135 = vshrl.u32 %v134, 7
  %v136 = vsub.s32 0, %v135
  %v137 = vrot.slane %v36, %v136
  %v138 = vlaneseq
  %v139 = vshrl.u32 %v138, 7
  %v140 = vsub.s32 1, %v139
  %v141 = vrot.slane %v36, %v140
  %v142 = vlaneseq
  %v143 = vshrl.u32 %v142, 7
  %v144 = vsub.s32 2, %v143
  %v145 = vrot.slane %v36, %v144
  %v146 = vlaneseq
  %v147 = vshrl.u32 %v146, 7
  %v148 = vsub.s32 3, %v147
  %v149 = vrot.slane %v36, %v148
  %v150 = vlaneseq
  %v151 = vshrl.u32 %v150, 7
  %v152 = vsub.s32 4, %v151
  %v153 = vrot.slane %v36, %v152
  %v154 = vlaneseq
  %v155 = vshrl.u32 %v154, 7
  %v156 = vsub.s32 5, %v155
  %v157 = vrot.slane %v36, %v156
  %v158 = vlaneseq
  %v159 = vshrl.u32 %v158, 7
  %v160 = vsub.s32 6, %v159
  %v161 = vrot.slane %v36, %v160
  %v162 = vlaneseq
  %v163 = vshrl.u32 %v162, 7
  %v164 = vsub.s32 7, %v163
  %v165 = vrot.slane %v36, %v164
  %v174 = vadd.f32 %v125, %v137
  %v175 = vadd.f32 %v126, %v141
  %v176 = vadd.f32 %v127, %v145
  %v177 = vadd.f32 %v128, %v149
  %v178 = vadd.f32 %v129, %v153
  %v179 = vadd.f32 %v130, %v157
  %v180 = vadd.f32 %v131, %v161
  %v181 = vadd.f32 %v132, %v165
  %v182 = vpack.c.bf16 %v174, %v174
  %v183 = vpack.c.bf16 %v175, %v175
  %v184 = vpack.c.bf16 %v176, %v176
  %v185 = vpack.c.bf16 %v177, %v177
  %v186 = vpack.c.bf16 %v178, %v178
  %v187 = vpack.c.bf16 %v179, %v179
  %v188 = vpack.c.bf16 %v180, %v180
  %v189 = vpack.c.bf16 %v181, %v181
  %v190 = vld [vmem:[%s2] sm:$0xf]
  %v191 = vld [vmem:[%s2 + $0x4] sm:$0xf]
  %v192 = vld [vmem:[%s2 + $0x8] sm:$0xf]
  %v193 = vld [vmem:[%s2 + $0xc] sm:$0xf]
  %v194 = vld [vmem:[%s2 + $0x10] sm:$0xf]
  %v195 = vld [vmem:[%s2 + $0x14] sm:$0xf]
  %v196 = vld [vmem:[%s2 + $0x18] sm:$0xf]
  %v197 = vld [vmem:[%s2 + $0x1c] sm:$0xf]
  %v198 = vld [vmem:[%s2 + $0x20] sm:$0xf]
  %v199 = vld [vmem:[%s2 + $0x24] sm:$0xf]
  %v200 = vld [vmem:[%s2 + $0x28] sm:$0xf]
  %v201 = vld [vmem:[%s2 + $0x2c] sm:$0xf]
  %v202 = vld [vmem:[%s2 + $0x30] sm:$0xf]
  %v203 = vld [vmem:[%s2 + $0x34] sm:$0xf]
  %v204 = vld [vmem:[%s2 + $0x38] sm:$0xf]
  %v205 = vld [vmem:[%s2 + $0x3c] sm:$0xf]
  %v206 = vld [vmem:[%s2 + $0x40] sm:$0xf]
  %v207 = vld [vmem:[%s2 + $0x44] sm:$0xf]
  %v208 = vld [vmem:[%s2 + $0x48] sm:$0xf]
  %v209 = vld [vmem:[%s2 + $0x4c] sm:$0xf]
  %v210 = vld [vmem:[%s2 + $0x50] sm:$0xf]
  %v211 = vld [vmem:[%s2 + $0x54] sm:$0xf]
  %v212 = vld [vmem:[%s2 + $0x58] sm:$0xf]
  %v213 = vld [vmem:[%s2 + $0x5c] sm:$0xf]
  %v214 = vld [vmem:[%s2 + $0x60] sm:$0xf]
  %v215 = vld [vmem:[%s2 + $0x64] sm:$0xf]
  %v216 = vld [vmem:[%s2 + $0x68] sm:$0xf]
  %v217 = vld [vmem:[%s2 + $0x6c] sm:$0xf]
  %v218 = vld [vmem:[%s2 + $0x70] sm:$0xf]
  %v219 = vld [vmem:[%s2 + $0x74] sm:$0xf]
  %v220 = vld [vmem:[%s2 + $0x78] sm:$0xf]
  %v221 = vld [vmem:[%s2 + $0x7c] sm:$0xf]
  %v222 = vld [vmem:[%s2 + $0x80] sm:$0xf]
  %v223 = vld [vmem:[%s2 + $0x84] sm:$0xf]
  %v224 = vld [vmem:[%s2 + $0x88] sm:$0xf]
  %v225 = vld [vmem:[%s2 + $0x8c] sm:$0xf]
  %v226 = vld [vmem:[%s2 + $0x90] sm:$0xf]
  %v227 = vld [vmem:[%s2 + $0x94] sm:$0xf]
  %v228 = vld [vmem:[%s2 + $0x98] sm:$0xf]
  %v229 = vld [vmem:[%s2 + $0x9c] sm:$0xf]
  %v230 = vld [vmem:[%s2 + $0xa0] sm:$0xf]
  %v231 = vld [vmem:[%s2 + $0xa4] sm:$0xf]
  %v232 = vld [vmem:[%s2 + $0xa8] sm:$0xf]
  %v233 = vld [vmem:[%s2 + $0xac] sm:$0xf]
  %v234 = vld [vmem:[%s2 + $0xb0] sm:$0xf]
  %v235 = vld [vmem:[%s2 + $0xb4] sm:$0xf]
  %v236 = vld [vmem:[%s2 + $0xb8] sm:$0xf]
  %v237 = vld [vmem:[%s2 + $0xbc] sm:$0xf]
  %v238 = vld [vmem:[%s2 + $0xc0] sm:$0xf]
  %v239 = vld [vmem:[%s2 + $0xc4] sm:$0xf]
  %v240 = vld [vmem:[%s2 + $0xc8] sm:$0xf]
  %v241 = vld [vmem:[%s2 + $0xcc] sm:$0xf]
  %v242 = vld [vmem:[%s2 + $0xd0] sm:$0xf]
  %v243 = vld [vmem:[%s2 + $0xd4] sm:$0xf]
  %v244 = vld [vmem:[%s2 + $0xd8] sm:$0xf]
  %v245 = vld [vmem:[%s2 + $0xdc] sm:$0xf]
  %v246 = vld [vmem:[%s2 + $0xe0] sm:$0xf]
  %v247 = vld [vmem:[%s2 + $0xe4] sm:$0xf]
  %v248 = vld [vmem:[%s2 + $0xe8] sm:$0xf]
  %v249 = vld [vmem:[%s2 + $0xec] sm:$0xf]
  %v250 = vld [vmem:[%s2 + $0xf0] sm:$0xf]
  %v251 = vld [vmem:[%s2 + $0xf4] sm:$0xf]
  %v252 = vld [vmem:[%s2 + $0xf8] sm:$0xf]
  %v253 = vld [vmem:[%s2 + $0xfc] sm:$0xf]
  %v254 = vld [vmem:[%s2 + $0x100] sm:$0xf]
  %v255 = vld [vmem:[%s2 + $0x104] sm:$0xf]
  %v256 = vld [vmem:[%s2 + $0x108] sm:$0xf]
  %v257 = vld [vmem:[%s2 + $0x10c] sm:$0xf]
  %v258 = vld [vmem:[%s2 + $0x110] sm:$0xf]
  %v259 = vld [vmem:[%s2 + $0x114] sm:$0xf]
  %v260 = vld [vmem:[%s2 + $0x118] sm:$0xf]
  %v261 = vld [vmem:[%s2 + $0x11c] sm:$0xf]
  %v262 = vld [vmem:[%s2 + $0x120] sm:$0xf]
  %v263 = vld [vmem:[%s2 + $0x124] sm:$0xf]
  %v264 = vld [vmem:[%s2 + $0x128] sm:$0xf]
  %v265 = vld [vmem:[%s2 + $0x12c] sm:$0xf]
  %v266 = vld [vmem:[%s2 + $0x130] sm:$0xf]
  %v267 = vld [vmem:[%s2 + $0x134] sm:$0xf]
  %v268 = vld [vmem:[%s2 + $0x138] sm:$0xf]
  %v269 = vld [vmem:[%s2 + $0x13c] sm:$0xf]
  %v270 = vld [vmem:[%s2 + $0x140] sm:$0xf]
  %v271 = vld [vmem:[%s2 + $0x144] sm:$0xf]
  %v272 = vld [vmem:[%s2 + $0x148] sm:$0xf]
  %v273 = vld [vmem:[%s2 + $0x14c] sm:$0xf]
  %v274 = vld [vmem:[%s2 + $0x150] sm:$0xf]
  %v275 = vld [vmem:[%s2 + $0x154] sm:$0xf]
  %v276 = vld [vmem:[%s2 + $0x158] sm:$0xf]
  %v277 = vld [vmem:[%s2 + $0x15c] sm:$0xf]
  %v278 = vld [vmem:[%s2 + $0x160] sm:$0xf]
  %v279 = vld [vmem:[%s2 + $0x164] sm:$0xf]
  %v280 = vld [vmem:[%s2 + $0x168] sm:$0xf]
  %v281 = vld [vmem:[%s2 + $0x16c] sm:$0xf]
  %v282 = vld [vmem:[%s2 + $0x170] sm:$0xf]
  %v283 = vld [vmem:[%s2 + $0x174] sm:$0xf]
  %v284 = vld [vmem:[%s2 + $0x178] sm:$0xf]
  %v285 = vld [vmem:[%s2 + $0x17c] sm:$0xf]
  %v286 = vld [vmem:[%s2 + $0x180] sm:$0xf]
  %v287 = vld [vmem:[%s2 + $0x184] sm:$0xf]
  %v288 = vld [vmem:[%s2 + $0x188] sm:$0xf]
  %v289 = vld [vmem:[%s2 + $0x18c] sm:$0xf]
  %v290 = vld [vmem:[%s2 + $0x190] sm:$0xf]
  %v291 = vld [vmem:[%s2 + $0x194] sm:$0xf]
  %v292 = vld [vmem:[%s2 + $0x198] sm:$0xf]
  %v293 = vld [vmem:[%s2 + $0x19c] sm:$0xf]
  %v294 = vld [vmem:[%s2 + $0x1a0] sm:$0xf]
  %v295 = vld [vmem:[%s2 + $0x1a4] sm:$0xf]
  %v296 = vld [vmem:[%s2 + $0x1a8] sm:$0xf]
  %v297 = vld [vmem:[%s2 + $0x1ac] sm:$0xf]
  %v298 = vld [vmem:[%s2 + $0x1b0] sm:$0xf]
  %v299 = vld [vmem:[%s2 + $0x1b4] sm:$0xf]
  %v300 = vld [vmem:[%s2 + $0x1b8] sm:$0xf]
  %v301 = vld [vmem:[%s2 + $0x1bc] sm:$0xf]
  %v302 = vld [vmem:[%s2 + $0x1c0] sm:$0xf]
  %v303 = vld [vmem:[%s2 + $0x1c4] sm:$0xf]
  %v304 = vld [vmem:[%s2 + $0x1c8] sm:$0xf]
  %v305 = vld [vmem:[%s2 + $0x1cc] sm:$0xf]
  %v306 = vld [vmem:[%s2 + $0x1d0] sm:$0xf]
  %v307 = vld [vmem:[%s2 + $0x1d4] sm:$0xf]
  %v308 = vld [vmem:[%s2 + $0x1d8] sm:$0xf]
  %v309 = vld [vmem:[%s2 + $0x1dc] sm:$0xf]
  %v310 = vld [vmem:[%s2 + $0x1e0] sm:$0xf]
  %v311 = vld [vmem:[%s2 + $0x1e4] sm:$0xf]
  %v312 = vld [vmem:[%s2 + $0x1e8] sm:$0xf]
  %v313 = vld [vmem:[%s2 + $0x1ec] sm:$0xf]
  %v314 = vld [vmem:[%s2 + $0x1f0] sm:$0xf]
  %v315 = vld [vmem:[%s2 + $0x1f4] sm:$0xf]
  %v316 = vld [vmem:[%s2 + $0x1f8] sm:$0xf]
  %v317 = vld [vmem:[%s2 + $0x1fc] sm:$0xf]
  %v446 = vunpack.c.l.b16 %v190
  %v447 = vunpack.c.l.b16 %v191
  %v448 = vunpack.c.l.b16 %v192
  %v449 = vunpack.c.l.b16 %v193
  %v450 = vunpack.c.l.b16 %v194
  %v451 = vunpack.c.l.b16 %v195
  %v452 = vunpack.c.l.b16 %v196
  %v453 = vunpack.c.l.b16 %v197
  %v454 = vunpack.c.l.b16 %v198
  %v455 = vunpack.c.l.b16 %v199
  %v456 = vunpack.c.l.b16 %v200
  %v457 = vunpack.c.l.b16 %v201
  %v458 = vunpack.c.l.b16 %v202
  %v459 = vunpack.c.l.b16 %v203
  %v460 = vunpack.c.l.b16 %v204
  %v461 = vunpack.c.l.b16 %v205
  %v462 = vunpack.c.l.b16 %v206
  %v463 = vunpack.c.l.b16 %v207
  %v464 = vunpack.c.l.b16 %v208
  %v465 = vunpack.c.l.b16 %v209
  %v466 = vunpack.c.l.b16 %v210
  %v467 = vunpack.c.l.b16 %v211
  %v468 = vunpack.c.l.b16 %v212
  %v469 = vunpack.c.l.b16 %v213
  %v470 = vunpack.c.l.b16 %v214
  %v471 = vunpack.c.l.b16 %v215
  %v472 = vunpack.c.l.b16 %v216
  %v473 = vunpack.c.l.b16 %v217
  %v474 = vunpack.c.l.b16 %v218
  %v475 = vunpack.c.l.b16 %v219
  %v476 = vunpack.c.l.b16 %v220
  %v477 = vunpack.c.l.b16 %v221
  %v478 = vunpack.c.l.b16 %v222
  %v479 = vunpack.c.l.b16 %v223
  %v480 = vunpack.c.l.b16 %v224
  %v481 = vunpack.c.l.b16 %v225
  %v482 = vunpack.c.l.b16 %v226
  %v483 = vunpack.c.l.b16 %v227
  %v484 = vunpack.c.l.b16 %v228
  %v485 = vunpack.c.l.b16 %v229
  %v486 = vunpack.c.l.b16 %v230
  %v487 = vunpack.c.l.b16 %v231
  %v488 = vunpack.c.l.b16 %v232
  %v489 = vunpack.c.l.b16 %v233
  %v490 = vunpack.c.l.b16 %v234
  %v491 = vunpack.c.l.b16 %v235
  %v492 = vunpack.c.l.b16 %v236
  %v493 = vunpack.c.l.b16 %v237
  %v494 = vunpack.c.l.b16 %v238
  %v495 = vunpack.c.l.b16 %v239
  %v496 = vunpack.c.l.b16 %v240
  %v497 = vunpack.c.l.b16 %v241
  %v498 = vunpack.c.l.b16 %v242
  %v499 = vunpack.c.l.b16 %v243
  %v500 = vunpack.c.l.b16 %v244
  %v501 = vunpack.c.l.b16 %v245
  %v502 = vunpack.c.l.b16 %v246
  %v503 = vunpack.c.l.b16 %v247
  %v504 = vunpack.c.l.b16 %v248
  %v505 = vunpack.c.l.b16 %v249
  %v506 = vunpack.c.l.b16 %v250
  %v507 = vunpack.c.l.b16 %v251
  %v508 = vunpack.c.l.b16 %v252
  %v509 = vunpack.c.l.b16 %v253
  %v510 = vunpack.c.l.b16 %v254
  %v511 = vunpack.c.l.b16 %v255
  %v512 = vunpack.c.l.b16 %v256
  %v513 = vunpack.c.l.b16 %v257
  %v514 = vunpack.c.l.b16 %v258
  %v515 = vunpack.c.l.b16 %v259
  %v516 = vunpack.c.l.b16 %v260
  %v517 = vunpack.c.l.b16 %v261
  %v518 = vunpack.c.l.b16 %v262
  %v519 = vunpack.c.l.b16 %v263
  %v520 = vunpack.c.l.b16 %v264
  %v521 = vunpack.c.l.b16 %v265
  %v522 = vunpack.c.l.b16 %v266
  %v523 = vunpack.c.l.b16 %v267
  %v524 = vunpack.c.l.b16 %v268
  %v525 = vunpack.c.l.b16 %v269
  %v526 = vunpack.c.l.b16 %v270
  %v527 = vunpack.c.l.b16 %v271
  %v528 = vunpack.c.l.b16 %v272
  %v529 = vunpack.c.l.b16 %v273
  %v530 = vunpack.c.l.b16 %v274
  %v531 = vunpack.c.l.b16 %v275
  %v532 = vunpack.c.l.b16 %v276
  %v533 = vunpack.c.l.b16 %v277
  %v534 = vunpack.c.l.b16 %v278
  %v535 = vunpack.c.l.b16 %v279
  %v536 = vunpack.c.l.b16 %v280
  %v537 = vunpack.c.l.b16 %v281
  %v538 = vunpack.c.l.b16 %v282
  %v539 = vunpack.c.l.b16 %v283
  %v540 = vunpack.c.l.b16 %v284
  %v541 = vunpack.c.l.b16 %v285
  %v542 = vunpack.c.l.b16 %v286
  %v543 = vunpack.c.l.b16 %v287
  %v544 = vunpack.c.l.b16 %v288
  %v545 = vunpack.c.l.b16 %v289
  %v546 = vunpack.c.l.b16 %v290
  %v547 = vunpack.c.l.b16 %v291
  %v548 = vunpack.c.l.b16 %v292
  %v549 = vunpack.c.l.b16 %v293
  %v550 = vunpack.c.l.b16 %v294
  %v551 = vunpack.c.l.b16 %v295
  %v552 = vunpack.c.l.b16 %v296
  %v553 = vunpack.c.l.b16 %v297
  %v554 = vunpack.c.l.b16 %v298
  %v555 = vunpack.c.l.b16 %v299
  %v556 = vunpack.c.l.b16 %v300
  %v557 = vunpack.c.l.b16 %v301
  %v558 = vunpack.c.l.b16 %v302
  %v559 = vunpack.c.l.b16 %v303
  %v560 = vunpack.c.l.b16 %v304
  %v561 = vunpack.c.l.b16 %v305
  %v562 = vunpack.c.l.b16 %v306
  %v563 = vunpack.c.l.b16 %v307
  %v564 = vunpack.c.l.b16 %v308
  %v565 = vunpack.c.l.b16 %v309
  %v566 = vunpack.c.l.b16 %v310
  %v567 = vunpack.c.l.b16 %v311
  %v568 = vunpack.c.l.b16 %v312
  %v569 = vunpack.c.l.b16 %v313
  %v570 = vunpack.c.l.b16 %v314
  %v571 = vunpack.c.l.b16 %v315
  %v572 = vunpack.c.l.b16 %v316
  %v573 = vunpack.c.l.b16 %v317
  %v574 = vpack.c.b16 %v447, %v446
  %v575 = vpack.c.b16 %v449, %v448
  %v576 = vpack.c.b16 %v451, %v450
  %v577 = vpack.c.b16 %v453, %v452
  %v578 = vpack.c.b16 %v455, %v454
  %v579 = vpack.c.b16 %v457, %v456
  %v580 = vpack.c.b16 %v459, %v458
  %v581 = vpack.c.b16 %v461, %v460
  %v582 = vpack.c.b16 %v463, %v462
  %v583 = vpack.c.b16 %v465, %v464
  %v584 = vpack.c.b16 %v467, %v466
  %v585 = vpack.c.b16 %v469, %v468
  %v586 = vpack.c.b16 %v471, %v470
  %v587 = vpack.c.b16 %v473, %v472
  %v588 = vpack.c.b16 %v475, %v474
  %v589 = vpack.c.b16 %v477, %v476
  %v590 = vpack.c.b16 %v479, %v478
  %v591 = vpack.c.b16 %v481, %v480
  %v592 = vpack.c.b16 %v483, %v482
  %v593 = vpack.c.b16 %v485, %v484
  %v594 = vpack.c.b16 %v487, %v486
  %v595 = vpack.c.b16 %v489, %v488
  %v596 = vpack.c.b16 %v491, %v490
  %v597 = vpack.c.b16 %v493, %v492
  %v598 = vpack.c.b16 %v495, %v494
  %v599 = vpack.c.b16 %v497, %v496
  %v600 = vpack.c.b16 %v499, %v498
  %v601 = vpack.c.b16 %v501, %v500
  %v602 = vpack.c.b16 %v503, %v502
  %v603 = vpack.c.b16 %v505, %v504
  %v604 = vpack.c.b16 %v507, %v506
  %v605 = vpack.c.b16 %v509, %v508
  %v606 = vpack.c.b16 %v511, %v510
  %v607 = vpack.c.b16 %v513, %v512
  %v608 = vpack.c.b16 %v515, %v514
  %v609 = vpack.c.b16 %v517, %v516
  %v610 = vpack.c.b16 %v519, %v518
  %v611 = vpack.c.b16 %v521, %v520
  %v612 = vpack.c.b16 %v523, %v522
  %v613 = vpack.c.b16 %v525, %v524
  %v614 = vpack.c.b16 %v527, %v526
  %v615 = vpack.c.b16 %v529, %v528
  %v616 = vpack.c.b16 %v531, %v530
  %v617 = vpack.c.b16 %v533, %v532
  %v618 = vpack.c.b16 %v535, %v534
  %v619 = vpack.c.b16 %v537, %v536
  %v620 = vpack.c.b16 %v539, %v538
  %v621 = vpack.c.b16 %v541, %v540
  %v622 = vpack.c.b16 %v543, %v542
  %v623 = vpack.c.b16 %v545, %v544
  %v624 = vpack.c.b16 %v547, %v546
  %v625 = vpack.c.b16 %v549, %v548
  %v626 = vpack.c.b16 %v551, %v550
  %v627 = vpack.c.b16 %v553, %v552
  %v628 = vpack.c.b16 %v555, %v554
  %v629 = vpack.c.b16 %v557, %v556
  %v630 = vpack.c.b16 %v559, %v558
  %v631 = vpack.c.b16 %v561, %v560
  %v632 = vpack.c.b16 %v563, %v562
  %v633 = vpack.c.b16 %v565, %v564
  %v634 = vpack.c.b16 %v567, %v566
  %v635 = vpack.c.b16 %v569, %v568
  %v636 = vpack.c.b16 %v571, %v570
  %v637 = vpack.c.b16 %v573, %v572
  %702 = vmatprep.subr.bf16.mxu0 0
  %703 = vmatpush1.bf16.msra.mxu0 %v574
  %704 = vmatprep.subr.bf16.mxu0 0
  %705 = vmatpush1.bf16.msra.mxu0 %v575
  %706 = vmatprep.subr.bf16.mxu0 0
  %707 = vmatpush1.bf16.msra.mxu0 %v576
  %708 = vmatprep.subr.bf16.mxu0 0
  %709 = vmatpush1.bf16.msra.mxu0 %v577
  %710 = vmatprep.subr.bf16.mxu0 0
  %711 = vmatpush1.bf16.msra.mxu0 %v578
  %712 = vmatprep.subr.bf16.mxu0 0
  %713 = vmatpush1.bf16.msra.mxu0 %v579
  %714 = vmatprep.subr.bf16.mxu0 0
  %715 = vmatpush1.bf16.msra.mxu0 %v580
  %716 = vmatprep.subr.bf16.mxu0 0
  %717 = vmatpush1.bf16.msra.mxu0 %v581
  %718 = vmatprep.subr.bf16.mxu0 0
  %719 = vmatpush1.bf16.msra.mxu0 %v582
  %720 = vmatprep.subr.bf16.mxu0 0
  %721 = vmatpush1.bf16.msra.mxu0 %v583
  %722 = vmatprep.subr.bf16.mxu0 0
  %723 = vmatpush1.bf16.msra.mxu0 %v584
  %724 = vmatprep.subr.bf16.mxu0 0
  %725 = vmatpush1.bf16.msra.mxu0 %v585
  %726 = vmatprep.subr.bf16.mxu0 0
  %727 = vmatpush1.bf16.msra.mxu0 %v586
  %728 = vmatprep.subr.bf16.mxu0 0
  %729 = vmatpush1.bf16.msra.mxu0 %v587
  %730 = vmatprep.subr.bf16.mxu0 0
  %731 = vmatpush1.bf16.msra.mxu0 %v588
  %732 = vmatprep.subr.bf16.mxu0 0
  %733 = vmatpush1.bf16.msra.mxu0 %v589
  %734 = vmatprep.mubr.bf16.mxu0 %v183
  %735 = vmatmul.mubr.bf16.gmra.mrb[0].mxu0 %v182
  %v736 = vpop.f32.mrb[0].mxu0
  %v737 = vadd.f32 %v37, %v736
  %v738 = vpop.f32.mrb[0].mxu0
  %v739 = vpop.f32.mrb[0].mxu0
  %v740 = vpop.f32.mrb[0].mxu0
  %741 = vdwg.mxu0
  %742 = vmatprep.subr.bf16.mxu0 0
  %743 = vmatpush1.bf16.msra.mxu0 %v590
  %744 = vmatprep.subr.bf16.mxu0 0
  %745 = vmatpush1.bf16.msra.mxu0 %v591
  %746 = vmatprep.subr.bf16.mxu0 0
  %747 = vmatpush1.bf16.msra.mxu0 %v592
  %748 = vmatprep.subr.bf16.mxu0 0
  %749 = vmatpush1.bf16.msra.mxu0 %v593
  %750 = vmatprep.subr.bf16.mxu0 0
  %751 = vmatpush1.bf16.msra.mxu0 %v594
  %752 = vmatprep.subr.bf16.mxu0 0
  %753 = vmatpush1.bf16.msra.mxu0 %v595
  %754 = vmatprep.subr.bf16.mxu0 0
  %755 = vmatpush1.bf16.msra.mxu0 %v596
  %756 = vmatprep.subr.bf16.mxu0 0
  %757 = vmatpush1.bf16.msra.mxu0 %v597
  %758 = vmatprep.subr.bf16.mxu0 0
  %759 = vmatpush1.bf16.msra.mxu0 %v598
  %760 = vmatprep.subr.bf16.mxu0 0
  %761 = vmatpush1.bf16.msra.mxu0 %v599
  %762 = vmatprep.subr.bf16.mxu0 0
  %763 = vmatpush1.bf16.msra.mxu0 %v600
  %764 = vmatprep.subr.bf16.mxu0 0
  %765 = vmatpush1.bf16.msra.mxu0 %v601
  %766 = vmatprep.subr.bf16.mxu0 0
  %767 = vmatpush1.bf16.msra.mxu0 %v602
  %768 = vmatprep.subr.bf16.mxu0 0
  %769 = vmatpush1.bf16.msra.mxu0 %v603
  %770 = vmatprep.subr.bf16.mxu0 0
  %771 = vmatpush1.bf16.msra.mxu0 %v604
  %772 = vmatprep.subr.bf16.mxu0 0
  %773 = vmatpush1.bf16.msra.mxu0 %v605
  %774 = vmatprep.mubr.bf16.mxu0 %v185
  %775 = vmatmul.mubr.bf16.gmra.mrb[0].mxu0 %v184
  %v776 = vpop.f32.mrb[0].mxu0
  %v777 = vadd.f32 %v737, %v776
  %v778 = vpop.f32.mrb[0].mxu0
  %v779 = vpop.f32.mrb[0].mxu0
  %v780 = vpop.f32.mrb[0].mxu0
  %781 = vdwg.mxu0
  %782 = vmatprep.subr.bf16.mxu0 0
  %783 = vmatpush1.bf16.msra.mxu0 %v606
  %784 = vmatprep.subr.bf16.mxu0 0
  %785 = vmatpush1.bf16.msra.mxu0 %v607
  %786 = vmatprep.subr.bf16.mxu0 0
  %787 = vmatpush1.bf16.msra.mxu0 %v608
  %788 = vmatprep.subr.bf16.mxu0 0
  %789 = vmatpush1.bf16.msra.mxu0 %v609
  %790 = vmatprep.subr.bf16.mxu0 0
  %791 = vmatpush1.bf16.msra.mxu0 %v610
  %792 = vmatprep.subr.bf16.mxu0 0
  %793 = vmatpush1.bf16.msra.mxu0 %v611
  %794 = vmatprep.subr.bf16.mxu0 0
  %795 = vmatpush1.bf16.msra.mxu0 %v612
  %796 = vmatprep.subr.bf16.mxu0 0
  %797 = vmatpush1.bf16.msra.mxu0 %v613
  %798 = vmatprep.subr.bf16.mxu0 0
  %799 = vmatpush1.bf16.msra.mxu0 %v614
  %800 = vmatprep.subr.bf16.mxu0 0
  %801 = vmatpush1.bf16.msra.mxu0 %v615
  %802 = vmatprep.subr.bf16.mxu0 0
  %803 = vmatpush1.bf16.msra.mxu0 %v616
  %804 = vmatprep.subr.bf16.mxu0 0
  %805 = vmatpush1.bf16.msra.mxu0 %v617
  %806 = vmatprep.subr.bf16.mxu0 0
  %807 = vmatpush1.bf16.msra.mxu0 %v618
  %808 = vmatprep.subr.bf16.mxu0 0
  %809 = vmatpush1.bf16.msra.mxu0 %v619
  %810 = vmatprep.subr.bf16.mxu0 0
  %811 = vmatpush1.bf16.msra.mxu0 %v620
  %812 = vmatprep.subr.bf16.mxu0 0
  %813 = vmatpush1.bf16.msra.mxu0 %v621
  %814 = vmatprep.mubr.bf16.mxu0 %v187
  %815 = vmatmul.mubr.bf16.gmra.mrb[0].mxu0 %v186
  %v816 = vpop.f32.mrb[0].mxu0
  %v817 = vadd.f32 %v777, %v816
  %v818 = vpop.f32.mrb[0].mxu0
  %v819 = vpop.f32.mrb[0].mxu0
  %v820 = vpop.f32.mrb[0].mxu0
  %821 = vdwg.mxu0
  %822 = vmatprep.subr.bf16.mxu0 0
  %823 = vmatpush1.bf16.msra.mxu0 %v622
  %824 = vmatprep.subr.bf16.mxu0 0
  %825 = vmatpush1.bf16.msra.mxu0 %v623
  %826 = vmatprep.subr.bf16.mxu0 0
  %827 = vmatpush1.bf16.msra.mxu0 %v624
  %828 = vmatprep.subr.bf16.mxu0 0
  %829 = vmatpush1.bf16.msra.mxu0 %v625
  %830 = vmatprep.subr.bf16.mxu0 0
  %831 = vmatpush1.bf16.msra.mxu0 %v626
  %832 = vmatprep.subr.bf16.mxu0 0
  %833 = vmatpush1.bf16.msra.mxu0 %v627
  %834 = vmatprep.subr.bf16.mxu0 0
  %835 = vmatpush1.bf16.msra.mxu0 %v628
  %836 = vmatprep.subr.bf16.mxu0 0
  %837 = vmatpush1.bf16.msra.mxu0 %v629
  %838 = vmatprep.subr.bf16.mxu0 0
  %839 = vmatpush1.bf16.msra.mxu0 %v630
  %840 = vmatprep.subr.bf16.mxu0 0
  %841 = vmatpush1.bf16.msra.mxu0 %v631
  %842 = vmatprep.subr.bf16.mxu0 0
  %843 = vmatpush1.bf16.msra.mxu0 %v632
  %844 = vmatprep.subr.bf16.mxu0 0
  %845 = vmatpush1.bf16.msra.mxu0 %v633
  %846 = vmatprep.subr.bf16.mxu0 0
  %847 = vmatpush1.bf16.msra.mxu0 %v634
  %848 = vmatprep.subr.bf16.mxu0 0
  %849 = vmatpush1.bf16.msra.mxu0 %v635
  %850 = vmatprep.subr.bf16.mxu0 0
  %851 = vmatpush1.bf16.msra.mxu0 %v636
  %852 = vmatprep.subr.bf16.mxu0 0
  %853 = vmatpush1.bf16.msra.mxu0 %v637
  %854 = vmatprep.mubr.bf16.mxu0 %v189
  %855 = vmatmul.mubr.bf16.gmra.mrb[0].mxu0 %v188
  %v856 = vpop.f32.mrb[0].mxu0
  %v857 = vadd.f32 %v817, %v856
  %v858 = vpop.f32.mrb[0].mxu0
  %v859 = vpop.f32.mrb[0].mxu0
  %v860 = vpop.f32.mrb[0].mxu0
  %861 = vdwg.mxu0
  %v862 = vmax.f32 %v857, 0.0
  %v863 = vld [vmem:[%s1 + $0x3] ss:$0 sm:$0xff]
  %v864 = vld [vmem:[%s1 + $0x4] ss:$0 sm:$0xff]
  %v865 = vld [vmem:[%s1 + $0x5] ss:$0 sm:$0xff]
  %866 = vadd.xlane.f32.xlu0 %v862
  %v867 = vpop.xlane.xlu0 %866
  %v868 = vmul.f32 %v867, 0.0078125
  %v869 = vsub.f32 %v862, %v868
  %v870 = vmul.f32 %v869, %v869
  %871 = vadd.xlane.f32.xlu0 %v870
  %v872 = vpop.xlane.xlu0 %871
  %v873 = vmul.f32 %v872, 0.0078125
  %v874 = vadd.f32 %v873, 1e-05
  %v875 = vrsqrt.pop %v874
  %v876 = vmul.f32 %v869, %v875
  %v877 = vmul.f32 %v876, %v863
  %v878 = vadd.f32 %v877, %v864
  %v879 = vpack.c.bf16 %v878, %v878
  %v880 = vld [vmem:[%s3] sm:$0xf]
  %v881 = vld [vmem:[%s3 + $0x4] sm:$0xf]
  %v882 = vld [vmem:[%s3 + $0x8] sm:$0xf]
  %v883 = vld [vmem:[%s3 + $0xc] sm:$0xf]
  %v884 = vld [vmem:[%s3 + $0x10] sm:$0xf]
  %v885 = vld [vmem:[%s3 + $0x14] sm:$0xf]
  %v886 = vld [vmem:[%s3 + $0x18] sm:$0xf]
  %v887 = vld [vmem:[%s3 + $0x1c] sm:$0xf]
  %v888 = vld [vmem:[%s3 + $0x20] sm:$0xf]
  %v889 = vld [vmem:[%s3 + $0x24] sm:$0xf]
  %v890 = vld [vmem:[%s3 + $0x28] sm:$0xf]
  %v891 = vld [vmem:[%s3 + $0x2c] sm:$0xf]
  %v892 = vld [vmem:[%s3 + $0x30] sm:$0xf]
  %v893 = vld [vmem:[%s3 + $0x34] sm:$0xf]
  %v894 = vld [vmem:[%s3 + $0x38] sm:$0xf]
  %v895 = vld [vmem:[%s3 + $0x3c] sm:$0xf]
  %v912 = vunpack.c.l.b16 %v880
  %v913 = vunpack.c.l.b16 %v881
  %v914 = vunpack.c.l.b16 %v882
  %v915 = vunpack.c.l.b16 %v883
  %v916 = vunpack.c.l.b16 %v884
  %v917 = vunpack.c.l.b16 %v885
  %v918 = vunpack.c.l.b16 %v886
  %v919 = vunpack.c.l.b16 %v887
  %v920 = vunpack.c.l.b16 %v888
  %v921 = vunpack.c.l.b16 %v889
  %v922 = vunpack.c.l.b16 %v890
  %v923 = vunpack.c.l.b16 %v891
  %v924 = vunpack.c.l.b16 %v892
  %v925 = vunpack.c.l.b16 %v893
  %v926 = vunpack.c.l.b16 %v894
  %v927 = vunpack.c.l.b16 %v895
  %v928 = vpack.c.b16 %v913, %v912
  %v929 = vpack.c.b16 %v915, %v914
  %v930 = vpack.c.b16 %v917, %v916
  %v931 = vpack.c.b16 %v919, %v918
  %v932 = vpack.c.b16 %v921, %v920
  %v933 = vpack.c.b16 %v923, %v922
  %v934 = vpack.c.b16 %v925, %v924
  %v935 = vpack.c.b16 %v927, %v926
  %944 = vmatprep.subr.bf16.mxu0 0
  %945 = vmatpush1.bf16.msra.mxu0 %v928
  %946 = vmatprep.subr.bf16.mxu0 0
  %947 = vmatpush1.bf16.msra.mxu0 %v929
  %948 = vmatprep.subr.bf16.mxu0 0
  %949 = vmatpush1.bf16.msra.mxu0 %v930
  %950 = vmatprep.subr.bf16.mxu0 0
  %951 = vmatpush1.bf16.msra.mxu0 %v931
  %952 = vmatprep.subr.bf16.mxu0 0
  %953 = vmatpush1.bf16.msra.mxu0 %v932
  %954 = vmatprep.subr.bf16.mxu0 0
  %955 = vmatpush1.bf16.msra.mxu0 %v933
  %956 = vmatprep.subr.bf16.mxu0 0
  %957 = vmatpush1.bf16.msra.mxu0 %v934
  %958 = vmatprep.subr.bf16.mxu0 0
  %959 = vmatpush1.bf16.msra.mxu0 %v935
  %960 = vmatprep.subr.bf16.mxu0 0
  %961 = vmatpush1.bf16.msra.mxu0 0
  %962 = vmatprep.subr.bf16.mxu0 0
  %963 = vmatpush1.bf16.msra.mxu0 0
  %964 = vmatprep.subr.bf16.mxu0 0
  %965 = vmatpush1.bf16.msra.mxu0 0
  %966 = vmatprep.subr.bf16.mxu0 0
  %967 = vmatpush1.bf16.msra.mxu0 0
  %968 = vmatprep.subr.bf16.mxu0 0
  %969 = vmatpush1.bf16.msra.mxu0 0
  %970 = vmatprep.subr.bf16.mxu0 0
  %971 = vmatpush1.bf16.msra.mxu0 0
  %972 = vmatprep.subr.bf16.mxu0 0
  %973 = vmatpush1.bf16.msra.mxu0 0
  %974 = vmatprep.subr.bf16.mxu0 0
  %975 = vmatpush1.bf16.msra.mxu0 0
  %976 = vmatprep.mubr.bf16.mxu0 0
  %977 = vmatmul.mubr.bf16.gmra.mrb[0].mxu0 %v879
  %v978 = vpop.f32.mrb[0].mxu0
  %v979 = vadd.f32 %v865, %v978
  %v980 = vpop.f32.mrb[0].mxu0
  %v981 = vpop.f32.mrb[0].mxu0
  %v982 = vpop.f32.mrb[0].mxu0
  %983 = vdwg.mxu0
  %v984 = vmax.f32 %v979, 0.0
  %v985 = vpack.c.bf16 %v984, %v984
  %986 = vst [vmem:[%s4] sm:$0xf] %v985
  // Predicated region
  $region18: #{_lambda_.1} parent=0 // pred_check
    _
  $region19: #{_lambda_.1} parent=0 // pred_check_branch
    %988 = sbr.rel (0) target = $region21
  $region20: #{_lambda_.1} parent=0 // pred_region
    _
  $region21: #{_lambda_.1} parent=0 // pred_fallthru
    _
  // Predicated region
  $region22: #{_lambda_.1} parent=0 // pred_check
    _
  $region23: #{_lambda_.1} parent=0 // pred_check_branch
    %990 = sbr.rel (0) target = $region25
  $region24: #{_lambda_.1} parent=0 // pred_region
    _
  $region25: #{_lambda_.1} parent=0 // pred_fallthru
    _

</llo_original>
